<compile_context>
chip_gen: v7x
topology: tpu7x:2x2x1
jax: 0.10.0
libtpu: 0.0.40
codegen_flags: <defaults>
</compile_context>

<pallas_src>
import jax
import jax.numpy as jnp
from jax.experimental import pallas as pl
from jax.experimental.pallas import tpu as pltpu

# ---------------- module hyperparameters (from __init__ defaults) -----------
DIM = 4                # backbone input dim
HIDDEN_DIM = 64
OUTPUT_DIM = 32        # backbone output dim
NUM_SG = 230
LATTICE_N_DIM = 6
LATTICE_N_COMP = 1
ATOM_N_DIM = 3
ATOM_N_COMP = 1
N_ELEMENT = 8
MIN_BETA = 0.1
MAX_BETA = 2.0

POS = LATTICE_N_DIM * LATTICE_N_COMP          # 6
APOS = ATOM_N_DIM * ATOM_N_COMP               # 3
OFFSET = 1 + NUM_SG                           # 231
PROB_OUTPUT = 1 + NUM_SG + 3 * POS + 3 * APOS + N_ELEMENT   # 266

# ---------------- permuted / padded kernel output layout --------------------
# Non-beta columns (raw logits) occupy lanes [0, 248) of a 256-lane group;
# the 18 alpha/beta columns occupy lanes [256, 274) of a 128-lane group.
# Width padded to 384 (3 x 128 lanes): all stores are unmasked lane-dense
# slabs and the sigmoid epilogue runs on exactly one 128-lane group.
_NONBETA_SRC = tuple(range(0, OFFSET + POS)) \
             + tuple(range(OFFSET + 3 * POS, OFFSET + 3 * POS + APOS)) \
             + tuple(range(OFFSET + 3 * POS + 3 * APOS, PROB_OUTPUT))
_BETA_SRC = tuple(range(OFFSET + POS, OFFSET + 3 * POS)) \
          + tuple(range(OFFSET + 3 * POS + APOS, OFFSET + 3 * POS + 3 * APOS))
N_NONBETA = len(_NONBETA_SRC)   # 248
N_BETA = len(_BETA_SRC)         # 18
NONBETA_LANES = 256             # padded width of the raw-logit lane groups
BETA_LANES = 128                # padded width of the alpha/beta lane group
KERNEL_WIDTH = NONBETA_LANES + BETA_LANES   # 384

# kernel-layout positions used by the wrapper to slice the 9 outputs
_K_STOP = 0
_K_SG = 1
_K_MIXL = OFFSET                        # 231
_K_MIXA = OFFSET + POS                  # 237
_K_TYPE = OFFSET + POS + APOS           # 240
_K_ALPHA_L = NONBETA_LANES              # 256
_K_BETA_L = NONBETA_LANES + POS         # 262
_K_ALPHA_A = NONBETA_LANES + 2 * POS    # 268
_K_BETA_A = NONBETA_LANES + 2 * POS + APOS  # 271

# ---------------- tiling / VMEM budget constants -----------------------------
_MAX_TILE = 4096
# in-kernel f32 temporaries per row: h1(64) + h2(64) + nonbeta dot(256)
# + beta dot(128) + sigmoid temp(128), all f32
_TEMP_BYTES_PER_ROW = (2 * HIDDEN_DIM + NONBETA_LANES + 2 * BETA_LANES) * 4
_TILE_VMEM_BUDGET = 20 * 1024 * 1024     # budget used only to pick the tile
_VMEM_LIMIT_BYTES = 28 * 1024 * 1024     # > v5e 16 MiB default, < v7x 32 MiB scoped


# ------------------------------- kernel -------------------------------------
def _policy_kernel(s_ref, w1_ref, b1_ref, w2_ref, b2_ref,
                   wnb_ref, bnb_ref, wb_ref, bb_ref, out_ref):
    # layer 1 (K=4) and layer 2 (64 -> 64), f32 accumulate (MXU is <5% busy;
    # the kernel is store-bound, so operand narrowing buys nothing here)
    h = jnp.dot(s_ref[...], w1_ref[...], preferred_element_type=jnp.float32)
    h = jnp.maximum(h + b1_ref[...], 0.0)
    h = jnp.dot(h, w2_ref[...], preferred_element_type=jnp.float32)
    h = jnp.maximum(h + b2_ref[...], 0.0)
    # fused (w3 @ wo) head, split into a raw-logit part and a beta part so the
    # result streams straight into out_ref (no full-width temp + re-copy).
    nb = jnp.dot(h, wnb_ref[...], preferred_element_type=jnp.float32) + bnb_ref[...]
    out_ref[:, :NONBETA_LANES] = nb.astype(out_ref.dtype)
    # alpha/beta columns: max_beta*sigmoid(.)+min_beta, f32 epilogue, one
    # 128-lane group only; cast to the output dtype at the final store.
    bt = jnp.dot(h, wb_ref[...], preferred_element_type=jnp.float32) + bb_ref[...]
    out_ref[:, NONBETA_LANES:] = (
        MAX_BETA * jax.nn.sigmoid(bt) + MIN_BETA).astype(out_ref.dtype)


# ------------------------------ wrapper --------------------------------------
def _round_up(x, m):
    return ((x + m - 1) // m) * m


def _pick_batch_tile(batch, requested, out_bytes):
    """Pick a batch tile from a VMEM byte budget; keep grid steps even."""
    per_row = (2 * KERNEL_WIDTH * out_bytes     # output double-buffer
               + 2 * DIM * 4                    # input double-buffer
               + _TEMP_BYTES_PER_ROW)           # in-kernel f32 temps
    vmem_cap = max(8, (_TILE_VMEM_BUDGET // per_row) // 8 * 8)
    tile = _round_up(max(8, min(requested, vmem_cap, _MAX_TILE, batch)), 8)
    steps = -(-batch // tile)
    # v7x megacore: once there is enough work, force an even (>=2) number of
    # grid steps so both TensorCores get a full share of the "parallel" axis.
    if batch >= 512:
        steps = _round_up(max(steps, 2), 2)
        tile = _round_up(-(-batch // steps), 8)
    return tile


def prepare_kernel_params(params):
    """Fuse w3@wo exactly (f32), permute + pad head columns to kernel layout.

    Call ONCE (e.g. at module init) and reuse the result; doing this per
    forward call would dominate the sub-10us kernel for small batches.
    """
    w1, b1, w2, b2, w3, b3, wo, bo = params
    wf = w3.astype(jnp.float32) @ wo.astype(jnp.float32)            # (64, 266)
    bf = b3.astype(jnp.float32) @ wo.astype(jnp.float32) + bo.astype(jnp.float32)
    nb_idx = jnp.asarray(_NONBETA_SRC, dtype=jnp.int32)
    bt_idx = jnp.asarray(_BETA_SRC, dtype=jnp.int32)
    wnb = jnp.zeros((HIDDEN_DIM, NONBETA_LANES), jnp.float32)
    wnb = wnb.at[:, :N_NONBETA].set(wf[:, nb_idx])
    bnb = jnp.zeros((1, NONBETA_LANES), jnp.float32)
    bnb = bnb.at[:, :N_NONBETA].set(bf[:, nb_idx].reshape(1, -1))
    wb = jnp.zeros((HIDDEN_DIM, BETA_LANES), jnp.float32)
    wb = wb.at[:, :N_BETA].set(wf[:, bt_idx])
    bb = jnp.zeros((1, BETA_LANES), jnp.float32)
    bb = bb.at[:, :N_BETA].set(bf[:, bt_idx].reshape(1, -1))
    return (w1.astype(jnp.float32), b1.astype(jnp.float32).reshape(1, -1),
            w2.astype(jnp.float32), b2.astype(jnp.float32).reshape(1, -1),
            wnb, bnb, wb, bb)


def _run_pallas(s, kparams, batch_tile, out_dtype):
    B = s.shape[0]
    out_bytes = jnp.dtype(out_dtype).itemsize
    tile = _pick_batch_tile(B, batch_tile, out_bytes)
    padded = _round_up(B, tile)
    if padded != B:
        s = jnp.pad(s, ((0, padded - B), (0, 0)))
    w1, b1, w2, b2, wnb, bnb, wb, bb = kparams

    def full(a):
        return pl.BlockSpec(a.shape, lambda i: (0,) * a.ndim)

    out = pl.pallas_call(
        _policy_kernel,
        out_shape=jax.ShapeDtypeStruct((padded, KERNEL_WIDTH), out_dtype),
        grid_spec=pltpu.PrefetchScalarGridSpec(
            num_scalar_prefetch=0,
            grid=(padded // tile,),
            in_specs=[
                pl.BlockSpec((tile, DIM), lambda i: (i, 0)),
                full(w1), full(b1), full(w2), full(b2),
                full(wnb), full(bnb), full(wb), full(bb),
            ],
            out_specs=pl.BlockSpec((tile, KERNEL_WIDTH), lambda i: (i, 0)),
        ),
        compiler_params=pltpu.CompilerParams(
            dimension_semantics=("parallel",),
            vmem_limit_bytes=_VMEM_LIMIT_BYTES),
    )(s, w1, b1, w2, b2, wnb, bnb, wb, bb)
    # NOTE: padded rows are NOT copied away here (a standalone out[:B] would
    # re-read+re-write the whole slab); the row bound is folded into the
    # column slices in _split_outputs.
    return out


def _split_outputs(out, B):
    out_stop = out[:B, _K_STOP]
    out_sg = out[:B, _K_SG:_K_SG + NUM_SG]
    mix_l = out[:B, _K_MIXL:_K_MIXL + POS].reshape(-1, LATTICE_N_DIM, LATTICE_N_COMP)
    mix_a = out[:B, _K_MIXA:_K_MIXA + APOS].reshape(-1, ATOM_N_DIM, ATOM_N_COMP)
    type_logits = out[:B, _K_TYPE:_K_TYPE + N_ELEMENT].reshape(-1, N_ELEMENT)
    alpha_l = out[:B, _K_ALPHA_L:_K_ALPHA_L + POS].reshape(-1, LATTICE_N_DIM, LATTICE_N_COMP)
    beta_l = out[:B, _K_BETA_L:_K_BETA_L + POS].reshape(-1, LATTICE_N_DIM, LATTICE_N_COMP)
    alpha_a = out[:B, _K_ALPHA_A:_K_ALPHA_A + APOS].reshape(-1, ATOM_N_DIM, ATOM_N_COMP)
    beta_a = out[:B, _K_BETA_A:_K_BETA_A + APOS].reshape(-1, ATOM_N_DIM, ATOM_N_COMP)
    return [out_stop, out_sg, mix_l, alpha_l, beta_l, mix_a, alpha_a, beta_a,
            type_logits]


def bw_crystal_policy_forward(s, kparams, *, batch_tile=2048,
                              out_dtype=jnp.float32):
    """Returns the 9-element list matching BWCrystalPolicy.forward(s, sub).

    `kparams` must come from prepare_kernel_params (hoisted, call once).
    `out_dtype=jnp.bfloat16` is an opt-in that halves the dominant HBM store;
    matmul accumulation and the sigmoid epilogue stay f32 either way.
    """
    B = s.shape[0]
    out = _run_pallas(s.astype(jnp.float32), kparams, batch_tile, out_dtype)
    return _split_outputs(out, B)


# ------------------------- params / reference -------------------------------
def init_params(key):
    """Deterministic synthetic weights (backbone MLP + outlayer)."""
    ks = jax.random.split(key, 8)

    def lin(kw, kb, fan_in, fan_out):
        scale = 1.0 / jnp.sqrt(fan_in)
        w = jax.random.uniform(kw, (fan_in, fan_out), jnp.float32, -scale, scale)
        b = jax.random.uniform(kb, (1, fan_out), jnp.float32, -scale, scale)
        return w, b

    w1, b1 = lin(ks[0], ks[1], DIM, HIDDEN_DIM)
    w2, b2 = lin(ks[2], ks[3], HIDDEN_DIM, HIDDEN_DIM)
    w3, b3 = lin(ks[4], ks[5], HIDDEN_DIM, OUTPUT_DIM)
    wo, bo = lin(ks[6], ks[7], OUTPUT_DIM, PROB_OUTPUT)
    return (w1, b1, w2, b2, w3, b3, wo, bo)


def _reference_forward(s, params):
    w1, b1, w2, b2, w3, b3, wo, bo = params
    h = jnp.maximum(s @ w1 + b1, 0.0)
    h = jnp.maximum(h @ w2 + b2, 0.0)
    feat = h @ w3 + b3
    out = feat @ wo + bo
    o = OFFSET
    sig = lambda x: MAX_BETA * jax.nn.sigmoid(x) + MIN_BETA
    return [
        out[..., 0],
        out[..., 1:1 + NUM_SG],
        out[..., o:o + POS].reshape(-1, LATTICE_N_DIM, LATTICE_N_COMP),
        sig(out[..., o + POS:o + 2 * POS]).reshape(-1, LATTICE_N_DIM, LATTICE_N_COMP),
        sig(out[..., o + 2 * POS:o + 3 * POS]).reshape(-1, LATTICE_N_DIM, LATTICE_N_COMP),
        out[..., o + 3 * POS:o + 3 * POS + APOS].reshape(-1, ATOM_N_DIM, ATOM_N_COMP),
        sig(out[..., o + 3 * POS + APOS:o + 3 * POS + 2 * APOS]).reshape(-1, ATOM_N_DIM, ATOM_N_COMP),
        sig(out[..., o + 3 * POS + 2 * APOS:o + 3 * POS + 3 * APOS]).reshape(-1, ATOM_N_DIM, ATOM_N_COMP),
        out[..., o + 3 * POS + 3 * APOS:].reshape(-1, N_ELEMENT),
    ]


if __name__ == "__main__":
    key = jax.random.PRNGKey(0)
    k_param, k_s = jax.random.split(key)

    B = 12  # small batch, NOT a multiple of the tile -> exercises padding path
    params = init_params(k_param)
    # TODO(synk): spacegroup_emb / sub / to_dist are not used by forward().
    kparams = prepare_kernel_params(params)   # hoisted: fuse/permute/pad once
    s = jax.random.normal(k_s, (B, DIM), jnp.float32)

    refs = _reference_forward(s, params)

    # f32 output with a tiny tile: multi-step grid + ragged-batch padding.
    outs = bw_crystal_policy_forward(s, kparams, batch_tile=8)
    outs = jax.block_until_ready(outs)
    for got, ref in zip(outs, refs):
        assert got.shape == ref.shape, (got.shape, ref.shape)
        assert jnp.allclose(got, ref, atol=1e-4, rtol=1e-4), \
            float(jnp.max(jnp.abs(got - ref)))

    # Default large tile, f32 output (single grid step at this batch size).
    outs_big = bw_crystal_policy_forward(s, kparams)
    outs_big = jax.block_until_ready(outs_big)
    for got, ref in zip(outs_big, refs):
        assert got.shape == ref.shape, (got.shape, ref.shape)
        assert jnp.allclose(got, ref, atol=1e-4, rtol=1e-4), \
            float(jnp.max(jnp.abs(got - ref)))

    # Opt-in bf16 output (halves HBM store traffic); f32 compute + epilogue.
    outs_bf16 = bw_crystal_policy_forward(s, kparams, out_dtype=jnp.bfloat16)
    outs_bf16 = jax.block_until_ready(outs_bf16)
    for got, ref in zip(outs_bf16, refs):
        assert got.shape == ref.shape, (got.shape, ref.shape)
        assert jnp.allclose(got.astype(jnp.float32), ref, atol=5e-2, rtol=5e-2), \
            float(jnp.max(jnp.abs(got.astype(jnp.float32) - ref)))

    print("KERNEL_OK")
</pallas_src>

<mosaic_0001>
module attributes {stable_mosaic.version = 11 : i64} {
  func.func @_policy_kernel(%arg0: i32, %arg1: memref<8x4xf32, #tpu.memory_space<vmem>>, %arg2: memref<4x64xf32, #tpu.memory_space<vmem>>, %arg3: memref<1x64xf32, #tpu.memory_space<vmem>>, %arg4: memref<64x64xf32, #tpu.memory_space<vmem>>, %arg5: memref<1x64xf32, #tpu.memory_space<vmem>>, %arg6: memref<64x256xf32, #tpu.memory_space<vmem>>, %arg7: memref<1x256xf32, #tpu.memory_space<vmem>>, %arg8: memref<64x128xf32, #tpu.memory_space<vmem>>, %arg9: memref<1x128xf32, #tpu.memory_space<vmem>>, %arg10: memref<8x384xf32, #tpu.memory_space<vmem>>) attributes {dimension_semantics = [#tpu.dimension_semantics<parallel>], iteration_bounds = array<i64: 2>, scalar_prefetch = 0 : i64, scratch_operands = 0 : i64, tpu.core_type = #tpu.core_type<tc>, window_params = [{transform_indices = @transform_0, window_bounds = array<i64: 8, 4>}, {pipeline_mode = #tpu.pipeline_mode<synchronous>, transform_indices = @transform_1, window_bounds = array<i64: 4, 64>}, {pipeline_mode = #tpu.pipeline_mode<synchronous>, transform_indices = @transform_2, window_bounds = array<i64: 1, 64>}, {pipeline_mode = #tpu.pipeline_mode<synchronous>, transform_indices = @transform_3, window_bounds = array<i64: 64, 64>}, {pipeline_mode = #tpu.pipeline_mode<synchronous>, transform_indices = @transform_4, window_bounds = array<i64: 1, 64>}, {pipeline_mode = #tpu.pipeline_mode<synchronous>, transform_indices = @transform_5, window_bounds = array<i64: 64, 256>}, {pipeline_mode = #tpu.pipeline_mode<synchronous>, transform_indices = @transform_6, window_bounds = array<i64: 1, 256>}, {pipeline_mode = #tpu.pipeline_mode<synchronous>, transform_indices = @transform_7, window_bounds = array<i64: 64, 128>}, {pipeline_mode = #tpu.pipeline_mode<synchronous>, transform_indices = @transform_8, window_bounds = array<i64: 1, 128>}, {transform_indices = @transform_9, window_bounds = array<i64: 8, 384>}]} {
    %c0 = arith.constant 0 : index
    %c0_0 = arith.constant 0 : index
    %0 = vector.load %arg1[%c0, %c0_0] : memref<8x4xf32, #tpu.memory_space<vmem>>, vector<8x4xf32>
    %c0_1 = arith.constant 0 : index
    %c0_2 = arith.constant 0 : index
    %1 = vector.load %arg2[%c0_1, %c0_2] : memref<4x64xf32, #tpu.memory_space<vmem>>, vector<4x64xf32>
    %cst = arith.constant dense<0.000000e+00> : vector<8x64xf32>
    %2 = tpu.matmul %0, %1, %cst {dimension_numbers = #tpu.dot_dimension_numbers<[1], [0], [0], [1], [0, 0, 1, 1], [], []>} : vector<8x4xf32>, vector<4x64xf32>, vector<8x64xf32> -> vector<8x64xf32>
    %c0_3 = arith.constant 0 : index
    %c0_4 = arith.constant 0 : index
    %3 = vector.load %arg3[%c0_3, %c0_4] : memref<1x64xf32, #tpu.memory_space<vmem>>, vector<1x64xf32>
    %4 = vector.broadcast %3 : vector<1x64xf32> to vector<8x64xf32>
    %5 = arith.addf %2, %4 : vector<8x64xf32>
    %cst_5 = arith.constant 0.000000e+00 : f32
    %6 = vector.broadcast %cst_5 : f32 to vector<8x64xf32>
    %7 = arith.maximumf %5, %6 : vector<8x64xf32>
    %c0_6 = arith.constant 0 : index
    %c0_7 = arith.constant 0 : index
    %8 = vector.load %arg4[%c0_6, %c0_7] : memref<64x64xf32, #tpu.memory_space<vmem>>, vector<64x64xf32>
    %cst_8 = arith.constant dense<0.000000e+00> : vector<8x64xf32>
    %9 = tpu.matmul %7, %8, %cst_8 {dimension_numbers = #tpu.dot_dimension_numbers<[1], [0], [0], [1], [0, 0, 1, 1], [], []>} : vector<8x64xf32>, vector<64x64xf32>, vector<8x64xf32> -> vector<8x64xf32>
    %c0_9 = arith.constant 0 : index
    %c0_10 = arith.constant 0 : index
    %10 = vector.load %arg5[%c0_9, %c0_10] : memref<1x64xf32, #tpu.memory_space<vmem>>, vector<1x64xf32>
    %11 = vector.broadcast %10 : vector<1x64xf32> to vector<8x64xf32>
    %12 = arith.addf %9, %11 : vector<8x64xf32>
    %cst_11 = arith.constant 0.000000e+00 : f32
    %13 = vector.broadcast %cst_11 : f32 to vector<8x64xf32>
    %14 = arith.maximumf %12, %13 : vector<8x64xf32>
    %c0_12 = arith.constant 0 : index
    %c0_13 = arith.constant 0 : index
    %15 = vector.load %arg6[%c0_12, %c0_13] : memref<64x256xf32, #tpu.memory_space<vmem>>, vector<64x256xf32>
    %cst_14 = arith.constant dense<0.000000e+00> : vector<8x256xf32>
    %16 = tpu.matmul %14, %15, %cst_14 {dimension_numbers = #tpu.dot_dimension_numbers<[1], [0], [0], [1], [0, 0, 1, 1], [], []>} : vector<8x64xf32>, vector<64x256xf32>, vector<8x256xf32> -> vector<8x256xf32>
    %c0_15 = arith.constant 0 : index
    %c0_16 = arith.constant 0 : index
    %17 = vector.load %arg7[%c0_15, %c0_16] : memref<1x256xf32, #tpu.memory_space<vmem>>, vector<1x256xf32>
    %18 = vector.broadcast %17 : vector<1x256xf32> to vector<8x256xf32>
    %19 = arith.addf %16, %18 : vector<8x256xf32>
    %c0_17 = arith.constant 0 : index
    %c0_18 = arith.constant 0 : index
    %20 = vector.load %arg10[%c0_17, %c0_18] : memref<8x384xf32, #tpu.memory_space<vmem>>, vector<8x256xf32>
    tpu.vector_store %arg10[%c0_17, %c0_18], %19 {strides = array<i32>} : memref<8x384xf32, #tpu.memory_space<vmem>>, vector<8x256xf32>,
    %c0_19 = arith.constant 0 : index
    %c0_20 = arith.constant 0 : index
    %21 = vector.load %arg8[%c0_19, %c0_20] : memref<64x128xf32, #tpu.memory_space<vmem>>, vector<64x128xf32>
    %cst_21 = arith.constant dense<0.000000e+00> : vector<8x128xf32>
    %22 = tpu.matmul %14, %21, %cst_21 {dimension_numbers = #tpu.dot_dimension_numbers<[1], [0], [0], [1], [0, 0, 1, 1], [], []>} : vector<8x64xf32>, vector<64x128xf32>, vector<8x128xf32> -> vector<8x128xf32>
    %c0_22 = arith.constant 0 : index
    %c0_23 = arith.constant 0 : index
    %23 = vector.load %arg9[%c0_22, %c0_23] : memref<1x128xf32, #tpu.memory_space<vmem>>, vector<1x128xf32>
    %24 = vector.broadcast %23 : vector<1x128xf32> to vector<8x128xf32>
    %25 = arith.addf %22, %24 : vector<8x128xf32>
    %26 = arith.negf %25 : vector<8x128xf32>
    %27 = math.exp %26 : vector<8x128xf32>
    %cst_24 = arith.constant 1.000000e+00 : f32
    %28 = vector.broadcast %cst_24 : f32 to vector<8x128xf32>
    %29 = arith.addf %28, %27 : vector<8x128xf32>
    %30 = arith.divf %28, %29 : vector<8x128xf32>
    %cst_25 = arith.constant 2.000000e+00 : f32
    %31 = vector.broadcast %cst_25 : f32 to vector<8x128xf32>
    %32 = arith.mulf %31, %30 : vector<8x128xf32>
    %cst_26 = arith.constant 1.000000e-01 : f32
    %33 = vector.broadcast %cst_26 : f32 to vector<8x128xf32>
    %34 = arith.addf %32, %33 : vector<8x128xf32>
    %c0_27 = arith.constant 0 : index
    %c256 = arith.constant 256 : index
    %35 = vector.load %arg10[%c0_27, %c256] : memref<8x384xf32, #tpu.memory_space<vmem>>, vector<8x128xf32>
    tpu.vector_store %arg10[%c0_27, %c256], %34 {strides = array<i32>} : memref<8x384xf32, #tpu.memory_space<vmem>>, vector<8x128xf32>,
    return
  }
  func.func @transform_0(%arg0: i32) -> (i32, i32) {
    %c0_i32 = arith.constant 0 : i32
    %c0_i32_0 = arith.constant 0 : i32
    return %arg0, %c0_i32 : i32, i32
  }
  func.func @transform_1(%arg0: i32) -> (i32, i32) {
    %c0_i32 = arith.constant 0 : i32
    %c0_i32_0 = arith.constant 0 : i32
    %c0_i32_1 = arith.constant 0 : i32
    return %c0_i32, %c0_i32_0 : i32, i32
  }
  func.func @transform_2(%arg0: i32) -> (i32, i32) {
    %c0_i32 = arith.constant 0 : i32
    %c0_i32_0 = arith.constant 0 : i32
    %c0_i32_1 = arith.constant 0 : i32
    return %c0_i32, %c0_i32_0 : i32, i32
  }
  func.func @transform_3(%arg0: i32) -> (i32, i32) {
    %c0_i32 = arith.constant 0 : i32
    %c0_i32_0 = arith.constant 0 : i32
    %c0_i32_1 = arith.constant 0 : i32
    return %c0_i32, %c0_i32_0 : i32, i32
  }
  func.func @transform_4(%arg0: i32) -> (i32, i32) {
    %c0_i32 = arith.constant 0 : i32
    %c0_i32_0 = arith.constant 0 : i32
    %c0_i32_1 = arith.constant 0 : i32
    return %c0_i32, %c0_i32_0 : i32, i32
  }
  func.func @transform_5(%arg0: i32) -> (i32, i32) {
    %c0_i32 = arith.constant 0 : i32
    %c0_i32_0 = arith.constant 0 : i32
    %c0_i32_1 = arith.constant 0 : i32
    return %c0_i32, %c0_i32_0 : i32, i32
  }
  func.func @transform_6(%arg0: i32) -> (i32, i32) {
    %c0_i32 = arith.constant 0 : i32
    %c0_i32_0 = arith.constant 0 : i32
    %c0_i32_1 = arith.constant 0 : i32
    return %c0_i32, %c0_i32_0 : i32, i32
  }
  func.func @transform_7(%arg0: i32) -> (i32, i32) {
    %c0_i32 = arith.constant 0 : i32
    %c0_i32_0 = arith.constant 0 : i32
    %c0_i32_1 = arith.constant 0 : i32
    return %c0_i32, %c0_i32_0 : i32, i32
  }
  func.func @transform_8(%arg0: i32) -> (i32, i32) {
    %c0_i32 = arith.constant 0 : i32
    %c0_i32_0 = arith.constant 0 : i32
    %c0_i32_1 = arith.constant 0 : i32
    return %c0_i32, %c0_i32_0 : i32, i32
  }
  func.func @transform_9(%arg0: i32) -> (i32, i32) {
    %c0_i32 = arith.constant 0 : i32
    %c0_i32_0 = arith.constant 0 : i32
    return %arg0, %c0_i32 : i32, i32
  }
}

</mosaic_0001>

<llo_original>
// kernel: tpu_custom_call.1
$region0: #{tpu_custom_call.1}
  #allocation0 [shape = 'u32[]', space=smem, size = 0x4, offset = 0x4, fixed_abs, tag = 'smem constant byte address 0x4 - core index']
  #allocation1 [shape = 'u32[144,128]{1,0:T(1,128)}', space=vmem, size = 0x12000, scoped, tag = 'internal scratch']
  %s0 = inlined_call_operand.vmem [shape: f32[16,4], index: 0, kind: input, shape index: {}]
  %s1 = inlined_call_operand.vmem [shape: f32[4,64], index: 1, kind: input, shape index: {}]
  %s2 = inlined_call_operand.vmem [shape: f32[1,64], index: 2, kind: input, shape index: {}]
  %s3 = inlined_call_operand.hbm [shape: f32[64,64], index: 3, kind: input, shape index: {}]
  %s4 = inlined_call_operand.vmem [shape: f32[1,64], index: 4, kind: input, shape index: {}]
  %s5 = inlined_call_operand.hbm [shape: f32[64,256], index: 5, kind: input, shape index: {}]
  %s6 = inlined_call_operand.vmem [shape: f32[1,256], index: 6, kind: input, shape index: {}]
  %s7 = inlined_call_operand.hbm [shape: f32[64,128], index: 7, kind: input, shape index: {}]
  %s8 = inlined_call_operand.vmem [shape: f32[1,128], index: 8, kind: input, shape index: {}]
  %s9 = inlined_call_operand.hbm [shape: f32[16,384], index: 9, kind: output, shape index: {}]
  %s10 = sld [smem:[#allocation0]]
  $region81: #{tpu_custom_call.1} parent=0
    _
  %s12 = ssub.s32 1, %s10
  %s13 = scalar_select 0, %s12, %s10
  $region1: #{tpu_custom_call.1} parent=0
    #allocation2 [shape = 'u8[32768]{0}', space=vmem, size = 0x8000, scoped, tag = 'input window, operand 3, single buffered']
    #allocation3 [shape = 's32[2]{0}', space=sflag, size = 0x8, scoped, tag = 'scoped memory for tpu_custom_call.1']
    #allocation4 [shape = 's32[2]{0}', space=sflag, size = 0x8, scoped, tag = 'scoped memory for tpu_custom_call.1']
    #allocation5 [shape = 'u8[65536]{0}', space=vmem, size = 0x10000, scoped, tag = 'input window, operand 5, single buffered']
    #allocation6 [shape = 's32[1]{0}', space=sflag, size = 0x4, scoped, tag = 'scoped memory for tpu_custom_call.1']
    #allocation7 [shape = 'u8[32768]{0}', space=vmem, size = 0x8000, scoped, tag = 'input window, operand 7, single buffered']
    #allocation8 [shape = 'u8[24576]{0}', space=vmem, size = 0x6000, scoped, tag = 'output window, operand 0']
    %14 = vsyncpa [#allocation3], 0
    %15 = vsyncpa [#allocation6], 0
    %16 = vsyncpa [#allocation4], 0
    %s17 = scalar_lea.sflag [#allocation4], 1
    %18 = vsyncpa %s17, 0
    loop: start=0, step=1, limit=4
    $region2: #{tpu_custom_call.1} parent=1 // loop_pre_header
      _
    $region3: #{tpu_custom_call.1} parent=1 // loop_header
      %s20 = sphi 0, %s24
      %p21 = scmp.ge.s32.totalorder %s20, 4
      %s30 = sphi 0, %s32
      %s33 = sphi 0, %s30
      %s34 = sphi 0, %s33
      %s50 = sphi 0, %s34
      %s54 = sphi 0, %s54
      %s56 = sphi 0, %s54
      %s57 = sphi 0, %s56
      %s71 = sphi 0, %s57
      %s75 = sphi 0, %s75
      %s77 = sphi 0, %s75
      %s78 = sphi 0, %s77
      %s92 = sphi 0, %s78
      %s96 = sphi 0, %s96
      %s98 = sphi 0, %s96
      %s99 = sphi 0, %s98
      %s113 = sphi 0, %s99
      %s117 = sphi 0, %s117
      %s119 = sphi 0, %s117
      %s120 = sphi 0, %s119
      %s134 = sphi 0, %s120
      %s138 = sphi 0, %s138
      %s140 = sphi 0, %s138
      %s141 = sphi 0, %s140
      %s155 = sphi 0, %s141
      %s159 = sphi 0, %s159
      %s161 = sphi 0, %s159
      %s162 = sphi 0, %s161
      %s176 = sphi 0, %s162
      %s180 = sphi 0, %s180
      %s182 = sphi 0, %s180
      %s183 = sphi 0, %s182
      %s197 = sphi 0, %s183
      %s201 = sphi 0, %s201
      %s203 = sphi 0, %s201
      %s204 = sphi 0, %s203
      %s218 = sphi 0, %s204
      %s224 = sphi 0, %s226
      %s227 = sphi 0, %s224
      %s228 = sphi 0, %s227
      %s244 = sphi 0, %s228
    $region4: #{tpu_custom_call.1} parent=1 // loop_header_branch
      %23 = sbr.rel (%p21) target = $region8
    $region5: #{tpu_custom_call.1} parent=1 // loop_body
      %s25 = ssub.s32 %s20, 1
      %s26 = ssub.s32 %s20, 2
      %s27 = sadd.s32 %s20, 1
      %s28 = ssub.s32 %s20, %s27
      %p29 = scmp.eq.s32.totalorder %s28, 0
      %s31 = sadd.s32 %s30, 1
      %s32 = scalar_select %p29, %s30, %s31
      %p35 = pneg %p29
      %p36 = scmp.eq.s32.totalorder %s20, 1
      %p37 = por %p35, %p36
      %p38 = scmp.ne.s32.totalorder %s30, %s33
      %p39 = scmp.eq.s32.totalorder %s20, 0
      %p40 = por %p38, %p39
      %p41 = scmp.ne.s32.totalorder %s30, %s33
      %p42 = scmp.eq.s32.totalorder %s25, 1
      %p43 = por %p41, %p42
      %p44 = scmp.ne.s32.totalorder %s33, %s34
      %p45 = scmp.eq.s32.totalorder %s25, 0
      %p46 = por %p44, %p45
      %p47 = scmp.ne.s32.totalorder %s33, %s34
      %p48 = scmp.eq.s32.totalorder %s26, 1
      %p49 = por %p47, %p48
      %p51 = scmp.ne.s32.totalorder %s34, %s50
      %p52 = scmp.eq.s32.totalorder %s26, 0
      %p53 = por %p51, %p52
      %s55 = sadd.s32 %s54, 1
      %p58 = scmp.eq.s32.totalorder %s20, 1
      %p59 = scmp.ne.s32.totalorder %s54, %s56
      %p60 = scmp.eq.s32.totalorder %s20, 0
      %p61 = por %p59, %p60
      %p62 = scmp.ne.s32.totalorder %s54, %s56
      %p63 = scmp.eq.s32.totalorder %s25, 1
      %p64 = por %p62, %p63
      %p65 = scmp.ne.s32.totalorder %s56, %s57
      %p66 = scmp.eq.s32.totalorder %s25, 0
      %p67 = por %p65, %p66
      %p68 = scmp.ne.s32.totalorder %s56, %s57
      %p69 = scmp.eq.s32.totalorder %s26, 1
      %p70 = por %p68, %p69
      %p72 = scmp.ne.s32.totalorder %s57, %s71
      %p73 = scmp.eq.s32.totalorder %s26, 0
      %p74 = por %p72, %p73
      %s76 = sadd.s32 %s75, 1
      %p79 = scmp.eq.s32.totalorder %s20, 1
      %p80 = scmp.ne.s32.totalorder %s75, %s77
      %p81 = scmp.eq.s32.totalorder %s20, 0
      %p82 = por %p80, %p81
      %p83 = scmp.ne.s32.totalorder %s75, %s77
      %p84 = scmp.eq.s32.totalorder %s25, 1
      %p85 = por %p83, %p84
      %p86 = scmp.ne.s32.totalorder %s77, %s78
      %p87 = scmp.eq.s32.totalorder %s25, 0
      %p88 = por %p86, %p87
      %p89 = scmp.ne.s32.totalorder %s77, %s78
      %p90 = scmp.eq.s32.totalorder %s26, 1
      %p91 = por %p89, %p90
      %p93 = scmp.ne.s32.totalorder %s78, %s92
      %p94 = scmp.eq.s32.totalorder %s26, 0
      %p95 = por %p93, %p94
      %s97 = sadd.s32 %s96, 1
      %p100 = scmp.eq.s32.totalorder %s20, 1
      %p101 = scmp.ne.s32.totalorder %s96, %s98
      %p102 = scmp.eq.s32.totalorder %s20, 0
      %p103 = por %p101, %p102
      %p104 = scmp.ne.s32.totalorder %s96, %s98
      %p105 = scmp.eq.s32.totalorder %s25, 1
      %p106 = por %p104, %p105
      %p107 = scmp.ne.s32.totalorder %s98, %s99
      %p108 = scmp.eq.s32.totalorder %s25, 0
      %p109 = por %p107, %p108
      %p110 = scmp.ne.s32.totalorder %s98, %s99
      %p111 = scmp.eq.s32.totalorder %s26, 1
      %p112 = por %p110, %p111
      %p114 = scmp.ne.s32.totalorder %s99, %s113
      %p115 = scmp.eq.s32.totalorder %s26, 0
      %p116 = por %p114, %p115
      %s118 = sadd.s32 %s117, 1
      %p121 = scmp.eq.s32.totalorder %s20, 1
      %p122 = scmp.ne.s32.totalorder %s117, %s119
      %p123 = scmp.eq.s32.totalorder %s20, 0
      %p124 = por %p122, %p123
      %p125 = scmp.ne.s32.totalorder %s117, %s119
      %p126 = scmp.eq.s32.totalorder %s25, 1
      %p127 = por %p125, %p126
      %p128 = scmp.ne.s32.totalorder %s119, %s120
      %p129 = scmp.eq.s32.totalorder %s25, 0
      %p130 = por %p128, %p129
      %p131 = scmp.ne.s32.totalorder %s119, %s120
      %p132 = scmp.eq.s32.totalorder %s26, 1
      %p133 = por %p131, %p132
      %p135 = scmp.ne.s32.totalorder %s120, %s134
      %p136 = scmp.eq.s32.totalorder %s26, 0
      %p137 = por %p135, %p136
      %s139 = sadd.s32 %s138, 1
      %p142 = scmp.eq.s32.totalorder %s20, 1
      %p143 = scmp.ne.s32.totalorder %s138, %s140
      %p144 = scmp.eq.s32.totalorder %s20, 0
      %p145 = por %p143, %p144
      %p146 = scmp.ne.s32.totalorder %s138, %s140
      %p147 = scmp.eq.s32.totalorder %s25, 1
      %p148 = por %p146, %p147
      %p149 = scmp.ne.s32.totalorder %s140, %s141
      %p150 = scmp.eq.s32.totalorder %s25, 0
      %p151 = por %p149, %p150
      %p152 = scmp.ne.s32.totalorder %s140, %s141
      %p153 = scmp.eq.s32.totalorder %s26, 1
      %p154 = por %p152, %p153
      %p156 = scmp.ne.s32.totalorder %s141, %s155
      %p157 = scmp.eq.s32.totalorder %s26, 0
      %p158 = por %p156, %p157
      %s160 = sadd.s32 %s159, 1
      %p163 = scmp.eq.s32.totalorder %s20, 1
      %p164 = scmp.ne.s32.totalorder %s159, %s161
      %p165 = scmp.eq.s32.totalorder %s20, 0
      %p166 = por %p164, %p165
      %p167 = scmp.ne.s32.totalorder %s159, %s161
      %p168 = scmp.eq.s32.totalorder %s25, 1
      %p169 = por %p167, %p168
      %p170 = scmp.ne.s32.totalorder %s161, %s162
      %p171 = scmp.eq.s32.totalorder %s25, 0
      %p172 = por %p170, %p171
      %p173 = scmp.ne.s32.totalorder %s161, %s162
      %p174 = scmp.eq.s32.totalorder %s26, 1
      %p175 = por %p173, %p174
      %p177 = scmp.ne.s32.totalorder %s162, %s176
      %p178 = scmp.eq.s32.totalorder %s26, 0
      %p179 = por %p177, %p178
      %s181 = sadd.s32 %s180, 1
      %p184 = scmp.eq.s32.totalorder %s20, 1
      %p185 = scmp.ne.s32.totalorder %s180, %s182
      %p186 = scmp.eq.s32.totalorder %s20, 0
      %p187 = por %p185, %p186
      %p188 = scmp.ne.s32.totalorder %s180, %s182
      %p189 = scmp.eq.s32.totalorder %s25, 1
      %p190 = por %p188, %p189
      %p191 = scmp.ne.s32.totalorder %s182, %s183
      %p192 = scmp.eq.s32.totalorder %s25, 0
      %p193 = por %p191, %p192
      %p194 = scmp.ne.s32.totalorder %s182, %s183
      %p195 = scmp.eq.s32.totalorder %s26, 1
      %p196 = por %p194, %p195
      %p198 = scmp.ne.s32.totalorder %s183, %s197
      %p199 = scmp.eq.s32.totalorder %s26, 0
      %p200 = por %p198, %p199
      %s202 = sadd.s32 %s201, 1
      %p205 = scmp.eq.s32.totalorder %s20, 1
      %p206 = scmp.ne.s32.totalorder %s201, %s203
      %p207 = scmp.eq.s32.totalorder %s20, 0
      %p208 = por %p206, %p207
      %p209 = scmp.ne.s32.totalorder %s201, %s203
      %p210 = scmp.eq.s32.totalorder %s25, 1
      %p211 = por %p209, %p210
      %p212 = scmp.ne.s32.totalorder %s203, %s204
      %p213 = scmp.eq.s32.totalorder %s25, 0
      %p214 = por %p212, %p213
      %p215 = scmp.ne.s32.totalorder %s203, %s204
      %p216 = scmp.eq.s32.totalorder %s26, 1
      %p217 = por %p215, %p216
      %p219 = scmp.ne.s32.totalorder %s204, %s218
      %p220 = scmp.eq.s32.totalorder %s26, 0
      %p221 = por %p219, %p220
      %s222 = ssub.s32 %s20, %s27
      %p223 = scmp.eq.s32.totalorder %s222, 0
      %s225 = sadd.s32 %s224, 1
      %s226 = scalar_select %p223, %s224, %s225
      %p229 = pneg %p223
      %p230 = scmp.eq.s32.totalorder %s20, 1
      %p231 = por %p229, %p230
      %p232 = scmp.ne.s32.totalorder %s224, %s227
      %p233 = scmp.eq.s32.totalorder %s20, 0
      %p234 = por %p232, %p233
      %p235 = scmp.ne.s32.totalorder %s224, %s227
      %p236 = scmp.eq.s32.totalorder %s25, 1
      %p237 = por %p235, %p236
      %p238 = scmp.ne.s32.totalorder %s227, %s228
      %p239 = scmp.eq.s32.totalorder %s25, 0
      %p240 = por %p238, %p239
      %p241 = scmp.ne.s32.totalorder %s227, %s228
      %p242 = scmp.eq.s32.totalorder %s26, 1
      %p243 = por %p241, %p242
      %p245 = scmp.ne.s32.totalorder %s228, %s244
      %p246 = scmp.eq.s32.totalorder %s26, 0
      %p247 = por %p245, %p246
      %p248 = scmp.le.s32.totalorder 1, %s20
      %p249 = scmp.lt.s32.totalorder %s20, 3
      %p250 = pnand %p248, %p249
      %p251 = pneg %p250
      // Predicated region
      $region9: #{tpu_custom_call.1} parent=5 // pred_check
        _
      $region10: #{tpu_custom_call.1} parent=5 // pred_check_branch
        %253 = sbr.rel (%p250) target = $region12
      $region11: #{tpu_custom_call.1} parent=5 // pred_region
        %s254 = ssub.s32 %s20, 1
        // Predicated region
        $region13: #{tpu_custom_call.1} parent=11 // pred_check
          %p255 = pneg %p67
        $region14: #{tpu_custom_call.1} parent=11 // pred_check_branch
          %257 = sbr.rel (%p255) target = $region16
        $region15: #{tpu_custom_call.1} parent=11 // pred_region
          _
        $region16: #{tpu_custom_call.1} parent=11 // pred_fallthru
          _
        // Predicated region
        $region17: #{tpu_custom_call.1} parent=11 // pred_check
          %p258 = pneg %p88
        $region18: #{tpu_custom_call.1} parent=11 // pred_check_branch
          %260 = sbr.rel (%p258) target = $region20
        $region19: #{tpu_custom_call.1} parent=11 // pred_region
          _
        $region20: #{tpu_custom_call.1} parent=11 // pred_fallthru
          _
        // Predicated region
        $region21: #{tpu_custom_call.1} parent=11 // pred_check
          %p261 = pneg %p109
        $region22: #{tpu_custom_call.1} parent=11 // pred_check_branch
          %263 = sbr.rel (%p261) target = $region24
        $region23: #{tpu_custom_call.1} parent=11 // pred_region
          %s265 = ssub.s32 1024, 1024
          %266 = vsyncadd [#allocation3], %s265
          %s267 = sshll.u32 [#allocation2], 4
          %s268 = int_to_ptr.vmem [resolvable:$true] %s267
          %273 = dma.hbm_to_vmem [thread:$0]  %s3, 1024, %s268, [#allocation3], 128, 128, 8
        $region24: #{tpu_custom_call.1} parent=11 // pred_fallthru
          _
        // Predicated region
        $region25: #{tpu_custom_call.1} parent=11 // pred_check
          %p274 = pneg %p130
        $region26: #{tpu_custom_call.1} parent=11 // pred_check_branch
          %276 = sbr.rel (%p274) target = $region28
        $region27: #{tpu_custom_call.1} parent=11 // pred_region
          _
        $region28: #{tpu_custom_call.1} parent=11 // pred_fallthru
          _
        // Predicated region
        $region29: #{tpu_custom_call.1} parent=11 // pred_check
          %p277 = pneg %p151
        $region30: #{tpu_custom_call.1} parent=11 // pred_check_branch
          %279 = sbr.rel (%p277) target = $region32
        $region31: #{tpu_custom_call.1} parent=11 // pred_region
          %s281 = ssub.s32 2048, 2048
          %282 = vsyncadd [#allocation6], %s281
          %s283 = sshll.u32 [#allocation5], 4
          %s284 = int_to_ptr.vmem [resolvable:$true] %s283
          %289 = dma.hbm_to_vmem [thread:$0]  %s5, 2048, %s284, [#allocation6], 256, 256, 16
        $region32: #{tpu_custom_call.1} parent=11 // pred_fallthru
          _
        // Predicated region
        $region33: #{tpu_custom_call.1} parent=11 // pred_check
          %p290 = pneg %p172
        $region34: #{tpu_custom_call.1} parent=11 // pred_check_branch
          %292 = sbr.rel (%p290) target = $region36
        $region35: #{tpu_custom_call.1} parent=11 // pred_region
          _
        $region36: #{tpu_custom_call.1} parent=11 // pred_fallthru
          _
        // Predicated region
        $region37: #{tpu_custom_call.1} parent=11 // pred_check
          %p293 = pneg %p193
        $region38: #{tpu_custom_call.1} parent=11 // pred_check_branch
          %295 = sbr.rel (%p293) target = $region40
        $region39: #{tpu_custom_call.1} parent=11 // pred_region
          %s297 = ssub.s32 1024, 1024
          %298 = vsyncadd [#allocation6], %s297
          %s299 = sshll.u32 [#allocation7], 4
          %s300 = int_to_ptr.vmem [resolvable:$true] %s299
          %305 = dma.hbm_to_vmem [thread:$0]  %s7, 1024, %s300, [#allocation6], 128, 128, 8
        $region40: #{tpu_custom_call.1} parent=11 // pred_fallthru
          _
        // Predicated region
        $region41: #{tpu_custom_call.1} parent=11 // pred_check
          %p306 = pneg %p214
        $region42: #{tpu_custom_call.1} parent=11 // pred_check_branch
          %308 = sbr.rel (%p306) target = $region44
        $region43: #{tpu_custom_call.1} parent=11 // pred_region
          _
        $region44: #{tpu_custom_call.1} parent=11 // pred_fallthru
          _
      $region12: #{tpu_custom_call.1} parent=5 // pred_fallthru
        _
      %p309 = scmp.lt.s32.totalorder %s20, 2
      // Predicated region
      $region45: #{tpu_custom_call.1} parent=5 // pred_check
        %p310 = pneg %p309
      $region46: #{tpu_custom_call.1} parent=5 // pred_check_branch
        %312 = sbr.rel (%p310) target = $region48
      $region47: #{tpu_custom_call.1} parent=5 // pred_region
        // Predicated region
        $region49: #{tpu_custom_call.1} parent=47 // pred_check
          %p313 = pneg %p40
        $region50: #{tpu_custom_call.1} parent=47 // pred_check_branch
          %315 = sbr.rel (%p313) target = $region52
        $region51: #{tpu_custom_call.1} parent=47 // pred_region
          %p316 = scmp.lt.s32.totalorder %s20, 1
          %s317 = scalar_select %p316, %s20, 1
          %s318 = smul.addr %s317, 8
          %s319 = scalar_lea.vmem %s0, %s318
        $region52: #{tpu_custom_call.1} parent=47 // pred_fallthru
          _
      $region48: #{tpu_custom_call.1} parent=5 // pred_fallthru
        _
      %p320 = scmp.le.s32.totalorder 1, %s20
      %p321 = scmp.lt.s32.totalorder %s20, 3
      %p322 = pnand %p320, %p321
      %p323 = pneg %p322
      // Predicated region
      $region53: #{tpu_custom_call.1} parent=5 // pred_check
        _
      $region54: #{tpu_custom_call.1} parent=5 // pred_check_branch
        %325 = sbr.rel (%p322) target = $region56
      $region55: #{tpu_custom_call.1} parent=5 // pred_region
        %s326 = ssub.s32 %s20, 1
        // Predicated region
        $region57: #{tpu_custom_call.1} parent=55 // pred_check
          %p327 = pneg %p109
        $region58: #{tpu_custom_call.1} parent=55 // pred_check_branch
          %329 = sbr.rel (%p327) target = $region60
        $region59: #{tpu_custom_call.1} parent=55 // pred_region
          %330 = dma.done [#allocation3], 1024
        $region60: #{tpu_custom_call.1} parent=55 // pred_fallthru
          _
        // Predicated region
        $region61: #{tpu_custom_call.1} parent=55 // pred_check
          %p331 = pneg %p151
        $region62: #{tpu_custom_call.1} parent=55 // pred_check_branch
          %333 = sbr.rel (%p331) target = $region64
        $region63: #{tpu_custom_call.1} parent=55 // pred_region
          %334 = dma.done [#allocation6], 2048
        $region64: #{tpu_custom_call.1} parent=55 // pred_fallthru
          _
        // Predicated region
        $region65: #{tpu_custom_call.1} parent=55 // pred_check
          %p335 = pneg %p193
        $region66: #{tpu_custom_call.1} parent=55 // pred_check_branch
          %337 = sbr.rel (%p335) target = $region68
        $region67: #{tpu_custom_call.1} parent=55 // pred_region
          %338 = dma.done [#allocation6], 1024
        $region68: #{tpu_custom_call.1} parent=55 // pred_fallthru
          _
        %p339 = scmp.lt.s32.totalorder %s25, 1
        %s340 = scalar_select %p339, %s25, 1
        %s341 = smul.addr %s340, 8
        %s342 = scalar_lea.vmem %s0, %s341
        %p343 = pneg %p46
        %p344 = pneg %p43
        %p345 = pneg %p67
        %p346 = pneg %p64
        %p347 = pneg %p88
        %p348 = pneg %p85
        %p349 = pneg %p109
        %p350 = pneg %p106
        %p351 = pneg %p130
        %p352 = pneg %p127
        %p353 = pneg %p151
        %p354 = pneg %p148
        %p355 = pneg %p172
        %p356 = pneg %p169
        %p357 = pneg %p193
        %p358 = pneg %p190
        %p359 = pneg %p214
        %p360 = pneg %p211
        %p361 = pneg %p240
        %p362 = pneg %p237
        %s363 = sand.u32 %s227, 1
        %s364 = scalar_lea.sflag [#allocation4], %s363
        %s365 = sand.u32 %s227, 1
        %s366 = smul.addr %s365, 24
        %s367 = scalar_lea.vmem [#allocation8], %s366
        %p368 = scmp.lt.s32.totalorder %s25, 1
        %s369 = scalar_select %p368, %s25, 1
        %s370 = smul.addr %s369, 8
        %s371 = scalar_lea.vmem %s0, %s370
        %v372 = vld [vmem:[%s371] sm:$0xff]
        %v373 = vld [vmem:[%s1] sm:$0xf]
        %v374 = vld [vmem:[%s2] sm:$0x1]
        %v376 = vlaneseq
        %v377 = vshrl.u32 %v376, 7
        %v378 = vsub.s32 0, %v377
        %v379 = vrot.slane %v374, %v378
        %vm381 = vcmask 31744
        %v383 = vsel %vm381, %v372, 0
        %vm385 = vcmask 1043456
        %v387 = vsel %vm385, %v373, 0
        %389 = vmatprep.subr.mxu0 0.0
        %390 = vmatpush1.msra.mxu0 %v387
        %391 = vmatprep.subr.mxu0 0.0
        %392 = vmatpush1.msra.mxu0 0.0
        %393 = vmatprep.subr.mxu0 0.0
        %394 = vmatpush1.msra.mxu0 0.0
        %395 = vmatprep.subr.mxu0 0.0
        %396 = vmatpush1.msra.mxu0 0.0
        %397 = vmatprep.subr.mxu0 0.0
        %398 = vmatpush1.msra.mxu0 0.0
        %399 = vmatprep.subr.mxu0 0.0
        %400 = vmatpush1.msra.mxu0 0.0
        %401 = vmatprep.subr.mxu0 0.0
        %402 = vmatpush1.msra.mxu0 0.0
        %403 = vmatprep.subr.mxu0 0.0
        %404 = vmatpush1.msra.mxu0 0.0
        %405 = vmatprep.subr.mxu0 0.0
        %406 = vmatpush1.msra.mxu0 0.0
        %407 = vmatprep.subr.mxu0 0.0
        %408 = vmatpush1.msra.mxu0 0.0
        %409 = vmatprep.subr.mxu0 0.0
        %410 = vmatpush1.msra.mxu0 0.0
        %411 = vmatprep.subr.mxu0 0.0
        %412 = vmatpush1.msra.mxu0 0.0
        %413 = vmatprep.subr.mxu0 0.0
        %414 = vmatpush1.msra.mxu0 0.0
        %415 = vmatprep.subr.mxu0 0.0
        %416 = vmatpush1.msra.mxu0 0.0
        %417 = vmatprep.subr.mxu0 0.0
        %418 = vmatpush1.msra.mxu0 0.0
        %419 = vmatprep.subr.mxu0 0.0
        %420 = vmatpush1.msra.mxu0 0.0
        %421 = vmatprep.subr.mxu0 0.0
        %422 = vmatpush1.msra.mxu0 0.0
        %423 = vmatprep.subr.mxu0 0.0
        %424 = vmatpush1.msra.mxu0 0.0
        %425 = vmatprep.subr.mxu0 0.0
        %426 = vmatpush1.msra.mxu0 0.0
        %427 = vmatprep.subr.mxu0 0.0
        %428 = vmatpush1.msra.mxu0 0.0
        %429 = vmatprep.subr.mxu0 0.0
        %430 = vmatpush1.msra.mxu0 0.0
        %431 = vmatprep.subr.mxu0 0.0
        %432 = vmatpush1.msra.mxu0 0.0
        %433 = vmatprep.subr.mxu0 0.0
        %434 = vmatpush1.msra.mxu0 0.0
        %435 = vmatprep.subr.mxu0 0.0
        %436 = vmatpush1.msra.mxu0 0.0
        %437 = vmatprep.subr.mxu0 0.0
        %438 = vmatpush1.msra.mxu0 0.0
        %439 = vmatprep.subr.mxu0 0.0
        %440 = vmatpush1.msra.mxu0 0.0
        %441 = vmatprep.subr.mxu0 0.0
        %442 = vmatpush1.msra.mxu0 0.0
        %443 = vmatprep.subr.mxu0 0.0
        %444 = vmatpush1.msra.mxu0 0.0
        %445 = vmatprep.subr.mxu0 0.0
        %446 = vmatpush1.msra.mxu0 0.0
        %447 = vmatprep.subr.mxu0 0.0
        %448 = vmatpush1.msra.mxu0 0.0
        %449 = vmatprep.subr.mxu0 0.0
        %450 = vmatpush1.msra.mxu0 0.0
        %451 = vmatprep.subr.mxu0 0.0
        %452 = vmatpush1.msra.mxu0 0.0
        %453 = vmatprep.mubr.f32.mxu0 0.0
        %454 = vmatmul.mubr.f32.gmra.mrb[0].mxu0 %v383
        %v455 = vpop.f32.mrb[0].mxu0
        %v456 = vadd.f32 %v379, %v455
        %v457 = vpop.f32.mrb[0].mxu0
        %458 = vdwg.mxu0
        %v459 = vmax.f32 %v456, 0.0
        %v460 = vld [vmem:[#allocation2] sm:$0xff]
        %v461 = vld [vmem:[#allocation2 + $0x8] sm:$0xff]
        %v462 = vld [vmem:[#allocation2 + $0x10] sm:$0xff]
        %v463 = vld [vmem:[#allocation2 + $0x18] sm:$0xff]
        %v464 = vld [vmem:[#allocation2 + $0x20] sm:$0xff]
        %v465 = vld [vmem:[#allocation2 + $0x28] sm:$0xff]
        %v466 = vld [vmem:[#allocation2 + $0x30] sm:$0xff]
        %v467 = vld [vmem:[#allocation2 + $0x38] sm:$0xff]
        %v468 = vld [vmem:[%s4] sm:$0x1]
        %v470 = vlaneseq
        %v471 = vshrl.u32 %v470, 7
        %v472 = vsub.s32 0, %v471
        %v473 = vrot.slane %v468, %v472
        %vm475 = vcmask 523264
        %v477 = vsel %vm475, %v459, 0
        %479 = vmatprep.subr.mxu0 0.0
        %480 = vmatpush1.msra.mxu0 %v460
        %481 = vmatprep.subr.mxu0 0.0
        %482 = vmatpush1.msra.mxu0 %v461
        %483 = vmatprep.subr.mxu0 0.0
        %484 = vmatpush1.msra.mxu0 %v462
        %485 = vmatprep.subr.mxu0 0.0
        %486 = vmatpush1.msra.mxu0 %v463
        %487 = vmatprep.subr.mxu0 0.0
        %488 = vmatpush1.msra.mxu0 %v464
        %489 = vmatprep.subr.mxu0 0.0
        %490 = vmatpush1.msra.mxu0 %v465
        %491 = vmatprep.subr.mxu0 0.0
        %492 = vmatpush1.msra.mxu0 %v466
        %493 = vmatprep.subr.mxu0 0.0
        %494 = vmatpush1.msra.mxu0 %v467
        %495 = vmatprep.subr.mxu0 0.0
        %496 = vmatpush1.msra.mxu0 0.0
        %497 = vmatprep.subr.mxu0 0.0
        %498 = vmatpush1.msra.mxu0 0.0
        %499 = vmatprep.subr.mxu0 0.0
        %500 = vmatpush1.msra.mxu0 0.0
        %501 = vmatprep.subr.mxu0 0.0
        %502 = vmatpush1.msra.mxu0 0.0
        %503 = vmatprep.subr.mxu0 0.0
        %504 = vmatpush1.msra.mxu0 0.0
        %505 = vmatprep.subr.mxu0 0.0
        %506 = vmatpush1.msra.mxu0 0.0
        %507 = vmatprep.subr.mxu0 0.0
        %508 = vmatpush1.msra.mxu0 0.0
        %509 = vmatprep.subr.mxu0 0.0
        %510 = vmatpush1.msra.mxu0 0.0
        %511 = vmatprep.subr.mxu0 0.0
        %512 = vmatpush1.msra.mxu0 0.0
        %513 = vmatprep.subr.mxu0 0.0
        %514 = vmatpush1.msra.mxu0 0.0
        %515 = vmatprep.subr.mxu0 0.0
        %516 = vmatpush1.msra.mxu0 0.0
        %517 = vmatprep.subr.mxu0 0.0
        %518 = vmatpush1.msra.mxu0 0.0
        %519 = vmatprep.subr.mxu0 0.0
        %520 = vmatpush1.msra.mxu0 0.0
        %521 = vmatprep.subr.mxu0 0.0
        %522 = vmatpush1.msra.mxu0 0.0
        %523 = vmatprep.subr.mxu0 0.0
        %524 = vmatpush1.msra.mxu0 0.0
        %525 = vmatprep.subr.mxu0 0.0
        %526 = vmatpush1.msra.mxu0 0.0
        %527 = vmatprep.subr.mxu0 0.0
        %528 = vmatpush1.msra.mxu0 0.0
        %529 = vmatprep.subr.mxu0 0.0
        %530 = vmatpush1.msra.mxu0 0.0
        %531 = vmatprep.subr.mxu0 0.0
        %532 = vmatpush1.msra.mxu0 0.0
        %533 = vmatprep.subr.mxu0 0.0
        %534 = vmatpush1.msra.mxu0 0.0
        %535 = vmatprep.subr.mxu0 0.0
        %536 = vmatpush1.msra.mxu0 0.0
        %537 = vmatprep.subr.mxu0 0.0
        %538 = vmatpush1.msra.mxu0 0.0
        %539 = vmatprep.subr.mxu0 0.0
        %540 = vmatpush1.msra.mxu0 0.0
        %541 = vmatprep.subr.mxu0 0.0
        %542 = vmatpush1.msra.mxu0 0.0
        %543 = vmatprep.mubr.f32.mxu0 0.0
        %544 = vmatmul.mubr.f32.gmra.mrb[0].mxu0 %v477
        %v545 = vpop.f32.mrb[0].mxu0
        %v546 = vadd.f32 %v473, %v545
        %v547 = vpop.f32.mrb[0].mxu0
        %548 = vdwg.mxu0
        %v549 = vmax.f32 %v546, 0.0
        %v550 = vld [vmem:[#allocation5] sm:$0xff]
        %v551 = vld [vmem:[#allocation5 + $0x8] sm:$0xff]
        %v552 = vld [vmem:[#allocation5 + $0x10] sm:$0xff]
        %v553 = vld [vmem:[#allocation5 + $0x18] sm:$0xff]
        %v554 = vld [vmem:[#allocation5 + $0x20] sm:$0xff]
        %v555 = vld [vmem:[#allocation5 + $0x28] sm:$0xff]
        %v556 = vld [vmem:[#allocation5 + $0x30] sm:$0xff]
        %v557 = vld [vmem:[#allocation5 + $0x38] sm:$0xff]
        %v558 = vld [vmem:[#allocation5 + $0x40] sm:$0xff]
        %v559 = vld [vmem:[#allocation5 + $0x48] sm:$0xff]
        %v560 = vld [vmem:[#allocation5 + $0x50] sm:$0xff]
        %v561 = vld [vmem:[#allocation5 + $0x58] sm:$0xff]
        %v562 = vld [vmem:[#allocation5 + $0x60] sm:$0xff]
        %v563 = vld [vmem:[#allocation5 + $0x68] sm:$0xff]
        %v564 = vld [vmem:[#allocation5 + $0x70] sm:$0xff]
        %v565 = vld [vmem:[#allocation5 + $0x78] sm:$0xff]
        %v566 = vld [vmem:[%s6] sm:$0x3]
        %v568 = vlaneseq
        %v569 = vshrl.u32 %v568, 7
        %v570 = vsub.s32 0, %v569
        %v571 = vrot.slane %v566, %v570
        %v572 = vlaneseq
        %v573 = vshrl.u32 %v572, 7
        %v574 = vsub.s32 1, %v573
        %v575 = vrot.slane %v566, %v574
        %v579 = vsel %vm475, %v549, 0
        %581 = vmatprep.subr.mxu0 %v551
        %582 = vmatpush1.msra.mxu0 %v550
        %583 = vmatprep.subr.mxu0 %v553
        %584 = vmatpush1.msra.mxu0 %v552
        %585 = vmatprep.subr.mxu0 %v555
        %586 = vmatpush1.msra.mxu0 %v554
        %587 = vmatprep.subr.mxu0 %v557
        %588 = vmatpush1.msra.mxu0 %v556
        %589 = vmatprep.subr.mxu0 %v559
        %590 = vmatpush1.msra.mxu0 %v558
        %591 = vmatprep.subr.mxu0 %v561
        %592 = vmatpush1.msra.mxu0 %v560
        %593 = vmatprep.subr.mxu0 %v563
        %594 = vmatpush1.msra.mxu0 %v562
        %595 = vmatprep.subr.mxu0 %v565
        %596 = vmatpush1.msra.mxu0 %v564
        %597 = vmatprep.subr.mxu0 0.0
        %598 = vmatpush1.msra.mxu0 0.0
        %599 = vmatprep.subr.mxu0 0.0
        %600 = vmatpush1.msra.mxu0 0.0
        %601 = vmatprep.subr.mxu0 0.0
        %602 = vmatpush1.msra.mxu0 0.0
        %603 = vmatprep.subr.mxu0 0.0
        %604 = vmatpush1.msra.mxu0 0.0
        %605 = vmatprep.subr.mxu0 0.0
        %606 = vmatpush1.msra.mxu0 0.0
        %607 = vmatprep.subr.mxu0 0.0
        %608 = vmatpush1.msra.mxu0 0.0
        %609 = vmatprep.subr.mxu0 0.0
        %610 = vmatpush1.msra.mxu0 0.0
        %611 = vmatprep.subr.mxu0 0.0
        %612 = vmatpush1.msra.mxu0 0.0
        %613 = vmatprep.subr.mxu0 0.0
        %614 = vmatpush1.msra.mxu0 0.0
        %615 = vmatprep.subr.mxu0 0.0
        %616 = vmatpush1.msra.mxu0 0.0
        %617 = vmatprep.subr.mxu0 0.0
        %618 = vmatpush1.msra.mxu0 0.0
        %619 = vmatprep.subr.mxu0 0.0
        %620 = vmatpush1.msra.mxu0 0.0
        %621 = vmatprep.subr.mxu0 0.0
        %622 = vmatpush1.msra.mxu0 0.0
        %623 = vmatprep.subr.mxu0 0.0
        %624 = vmatpush1.msra.mxu0 0.0
        %625 = vmatprep.subr.mxu0 0.0
        %626 = vmatpush1.msra.mxu0 0.0
        %627 = vmatprep.subr.mxu0 0.0
        %628 = vmatpush1.msra.mxu0 0.0
        %629 = vmatprep.subr.mxu0 0.0
        %630 = vmatpush1.msra.mxu0 0.0
        %631 = vmatprep.subr.mxu0 0.0
        %632 = vmatpush1.msra.mxu0 0.0
        %633 = vmatprep.subr.mxu0 0.0
        %634 = vmatpush1.msra.mxu0 0.0
        %635 = vmatprep.subr.mxu0 0.0
        %636 = vmatpush1.msra.mxu0 0.0
        %637 = vmatprep.subr.mxu0 0.0
        %638 = vmatpush1.msra.mxu0 0.0
        %639 = vmatprep.subr.mxu0 0.0
        %640 = vmatpush1.msra.mxu0 0.0
        %641 = vmatprep.subr.mxu0 0.0
        %642 = vmatpush1.msra.mxu0 0.0
        %643 = vmatprep.subr.mxu0 0.0
        %644 = vmatpush1.msra.mxu0 0.0
        %645 = vmatprep.mubr.f32.mxu0 0.0
        %646 = vmatmul.mubr.f32.gmra.mrb[0].mxu0 %v579
        %v647 = vpop.f32.mrb[0].mxu0
        %v648 = vadd.f32 %v571, %v647
        %v649 = vpop.f32.mrb[0].mxu0
        %v650 = vadd.f32 %v575, %v649
        %651 = vdwg.mxu0
        %652 = vst [vmem:[%s367] sm:$0xff] %v648
        %653 = vst [vmem:[%s367 + $0x8] sm:$0xff] %v650
        %v654 = vld [vmem:[#allocation7] sm:$0xff]
        %v655 = vld [vmem:[#allocation7 + $0x8] sm:$0xff]
        %v656 = vld [vmem:[#allocation7 + $0x10] sm:$0xff]
        %v657 = vld [vmem:[#allocation7 + $0x18] sm:$0xff]
        %v658 = vld [vmem:[#allocation7 + $0x20] sm:$0xff]
        %v659 = vld [vmem:[#allocation7 + $0x28] sm:$0xff]
        %v660 = vld [vmem:[#allocation7 + $0x30] sm:$0xff]
        %v661 = vld [vmem:[#allocation7 + $0x38] sm:$0xff]
        %v662 = vld [vmem:[%s8] sm:$0x1]
        %v664 = vlaneseq
        %v665 = vshrl.u32 %v664, 7
        %v666 = vsub.s32 0, %v665
        %v667 = vrot.slane %v662, %v666
        %669 = vmatprep.subr.mxu0 0.0
        %670 = vmatpush1.msra.mxu0 %v654
        %671 = vmatprep.subr.mxu0 0.0
        %672 = vmatpush1.msra.mxu0 %v655
        %673 = vmatprep.subr.mxu0 0.0
        %674 = vmatpush1.msra.mxu0 %v656
        %675 = vmatprep.subr.mxu0 0.0
        %676 = vmatpush1.msra.mxu0 %v657
        %677 = vmatprep.subr.mxu0 0.0
        %678 = vmatpush1.msra.mxu0 %v658
        %679 = vmatprep.subr.mxu0 0.0
        %680 = vmatpush1.msra.mxu0 %v659
        %681 = vmatprep.subr.mxu0 0.0
        %682 = vmatpush1.msra.mxu0 %v660
        %683 = vmatprep.subr.mxu0 0.0
        %684 = vmatpush1.msra.mxu0 %v661
        %685 = vmatprep.subr.mxu0 0.0
        %686 = vmatpush1.msra.mxu0 0.0
        %687 = vmatprep.subr.mxu0 0.0
        %688 = vmatpush1.msra.mxu0 0.0
        %689 = vmatprep.subr.mxu0 0.0
        %690 = vmatpush1.msra.mxu0 0.0
        %691 = vmatprep.subr.mxu0 0.0
        %692 = vmatpush1.msra.mxu0 0.0
        %693 = vmatprep.subr.mxu0 0.0
        %694 = vmatpush1.msra.mxu0 0.0
        %695 = vmatprep.subr.mxu0 0.0
        %696 = vmatpush1.msra.mxu0 0.0
        %697 = vmatprep.subr.mxu0 0.0
        %698 = vmatpush1.msra.mxu0 0.0
        %699 = vmatprep.subr.mxu0 0.0
        %700 = vmatpush1.msra.mxu0 0.0
        %701 = vmatprep.subr.mxu0 0.0
        %702 = vmatpush1.msra.mxu0 0.0
        %703 = vmatprep.subr.mxu0 0.0
        %704 = vmatpush1.msra.mxu0 0.0
        %705 = vmatprep.subr.mxu0 0.0
        %706 = vmatpush1.msra.mxu0 0.0
        %707 = vmatprep.subr.mxu0 0.0
        %708 = vmatpush1.msra.mxu0 0.0
        %709 = vmatprep.subr.mxu0 0.0
        %710 = vmatpush1.msra.mxu0 0.0
        %711 = vmatprep.subr.mxu0 0.0
        %712 = vmatpush1.msra.mxu0 0.0
        %713 = vmatprep.subr.mxu0 0.0
        %714 = vmatpush1.msra.mxu0 0.0
        %715 = vmatprep.subr.mxu0 0.0
        %716 = vmatpush1.msra.mxu0 0.0
        %717 = vmatprep.subr.mxu0 0.0
        %718 = vmatpush1.msra.mxu0 0.0
        %719 = vmatprep.subr.mxu0 0.0
        %720 = vmatpush1.msra.mxu0 0.0
        %721 = vmatprep.subr.mxu0 0.0
        %722 = vmatpush1.msra.mxu0 0.0
        %723 = vmatprep.subr.mxu0 0.0
        %724 = vmatpush1.msra.mxu0 0.0
        %725 = vmatprep.subr.mxu0 0.0
        %726 = vmatpush1.msra.mxu0 0.0
        %727 = vmatprep.subr.mxu0 0.0
        %728 = vmatpush1.msra.mxu0 0.0
        %729 = vmatprep.subr.mxu0 0.0
        %730 = vmatpush1.msra.mxu0 0.0
        %731 = vmatprep.subr.mxu0 0.0
        %732 = vmatpush1.msra.mxu0 0.0
        %733 = vmatprep.mubr.f32.mxu0 0.0
        %734 = vmatmul.mubr.f32.gmra.mrb[0].mxu0 %v579
        %v735 = vpop.f32.mrb[0].mxu0
        %v736 = vadd.f32 %v667, %v735
        %v737 = vpop.f32.mrb[0].mxu0
        %738 = vdwg.mxu0
        %v739 = vxor.u32 %v736, 2147483648
        %v740 = vmul.f32 %v739, 1.442695
        %v741 = vpow.pop %v740
        %v742 = vadd.f32 %v741, 1.0
        %v743 = vrcp.pop %v742
        %v744 = vmul.f32 1.0, %v743
        %v745 = vmul.f32 %v744, 2.0
        %v746 = vadd.f32 %v745, 0.1
        %747 = vst [vmem:[%s367 + $0x10] sm:$0xff] %v746
        %s748 = sand.u32 %s227, 1
        %s749 = scalar_lea.sflag [#allocation4], %s748
        %s750 = sand.u32 %s227, 1
        %s751 = smul.addr %s750, 24
        %s752 = scalar_lea.vmem [#allocation8], %s751
        // Predicated region
        $region69: #{tpu_custom_call.1} parent=55 // pred_check
          %p753 = pneg %p237
        $region70: #{tpu_custom_call.1} parent=55 // pred_check_branch
          %755 = sbr.rel (%p753) target = $region72
        $region71: #{tpu_custom_call.1} parent=55 // pred_region
          %s757 = ssub.s32 384, 384
          %758 = vsyncadd %s749, %s757
          %s759 = smul.addr %s25, 3
          %s760 = smul.addr %s759, 128
          %s761 = scalar_lea.hbm %s9, %s760
          %s763 = sshll.u32 %s752, 4
          %s764 = int_to_ptr.vmem [resolvable:$true] %s763
          %766 = dma.vmem_to_hbm [thread:$0]  %s764, 384, %s761, %s749
        $region72: #{tpu_custom_call.1} parent=55 // pred_fallthru
          _
      $region56: #{tpu_custom_call.1} parent=5 // pred_fallthru
        _
      %p767 = scmp.le.s32.totalorder 2, %s20
      // Predicated region
      $region73: #{tpu_custom_call.1} parent=5 // pred_check
        %p768 = pneg %p767
      $region74: #{tpu_custom_call.1} parent=5 // pred_check_branch
        %770 = sbr.rel (%p768) target = $region76
      $region75: #{tpu_custom_call.1} parent=5 // pred_region
        %s771 = ssub.s32 %s20, 2
        // Predicated region
        $region77: #{tpu_custom_call.1} parent=75 // pred_check
          %p772 = pneg %p243
        $region78: #{tpu_custom_call.1} parent=75 // pred_check_branch
          %774 = sbr.rel (%p772) target = $region80
        $region79: #{tpu_custom_call.1} parent=75 // pred_region
          %s775 = sand.u32 %s228, 1
          %s776 = scalar_lea.sflag [#allocation4], %s775
          %s777 = sand.u32 %s228, 1
          %s778 = smul.addr %s777, 24
          %s779 = scalar_lea.vmem [#allocation8], %s778
          %780 = dma.done %s776, 384
        $region80: #{tpu_custom_call.1} parent=75 // pred_fallthru
          _
      $region76: #{tpu_custom_call.1} parent=5 // pred_fallthru
        _
    $region6: #{tpu_custom_call.1} parent=1 // loop_footer
      %s24 = sadd.s32 1, %s20
    $region7: #{tpu_custom_call.1} parent=1 // loop_footer_branch
      %19 = sbr.rel target = $region3
    $region8: #{tpu_custom_call.1} parent=1 // loop_exit
      _
    %781 = vsyncpa [#allocation3], 1
    %s782 = scalar_lea.sflag [#allocation3], 1
    %783 = vsyncpa %s782, 1
    %784 = vsyncpa [#allocation6], 1
    %785 = vsyncpa [#allocation4], 1
    %s786 = scalar_lea.sflag [#allocation4], 1
    %787 = vsyncpa %s786, 1

</llo_original>
